<compile_context>
chip_gen: v6e
topology: v6e:2x2x1
jax: 0.10.0
libtpu: 0.0.40
codegen_flags: <defaults>
</compile_context>

<pallas_src>
import jax
import jax.numpy as jnp
from jax.experimental import pallas as pl
from jax.experimental.pallas import tpu as pltpu

TEXT_DIM = 512
IMG_DIM = 512
CONCAT_DIM = TEXT_DIM + IMG_DIM  # 1024, fixed by nn.Linear(1024, n_labels)


def _round_up(x, m):
    return ((x + m - 1) // m) * m


def classifier_kernel(text_ref, img_ref, w_ref, b_ref, out_ref, cat_ref):
    # Fused concat: stage both 512-wide halves (cast to bf16 for the MXU) into
    # one [B_TILE, 1024] VMEM scratch, then a single K=1024 contraction.
    cat_ref[:, :TEXT_DIM] = text_ref[...].astype(jnp.bfloat16)
    cat_ref[:, TEXT_DIM:] = img_ref[...].astype(jnp.bfloat16)
    acc = jnp.dot(cat_ref[...], w_ref[...], preferred_element_type=jnp.float32)
    out_ref[...] = (acc + b_ref[...]).astype(out_ref.dtype)


def prepare_classifier_params(fc_weight, fc_bias):
    """ONE-TIME parameter prep (call at load time, not per forward).

    fc_weight: [n_labels, 1024] (PyTorch layout), fc_bias: [n_labels].
    Returns (w_bf16 [1024, padded_N], bias_f32 [1, padded_N], n_labels)."""
    n_labels = fc_weight.shape[0]
    padded_n = _round_up(n_labels, 128)
    w = fc_weight.T.astype(jnp.bfloat16)                      # [1024, n_labels]
    w = jnp.pad(w, ((0, 0), (0, padded_n - n_labels)))
    b = jnp.pad(fc_bias.astype(jnp.float32), (0, padded_n - n_labels))
    return w, b.reshape(1, padded_n), n_labels


def classifier_forward(text_emb, img_emb, w_prepared, bias_prepared, n_labels):
    """text_emb: [B, 512], img_emb: [B, 512] (f32); weights from
    prepare_classifier_params. Returns logits [B, n_labels] in f32."""
    B = text_emb.shape[0]
    padded_n = w_prepared.shape[1]

    # B tiling: multiples of 8 sublanes, up to 128 rows per MXU pass.
    b_tile = min(128, _round_up(B, 8))
    padded_b = _round_up(B, b_tile)
    if padded_b != B:
        text_emb = jnp.pad(text_emb, ((0, padded_b - B), (0, 0)))
        img_emb = jnp.pad(img_emb, ((0, padded_b - B), (0, 0)))

    # N tiling: largest of 512/256/128 that divides the padded label count.
    n_tile = next(t for t in (512, 256, 128) if padded_n % t == 0)

    grid = (padded_b // b_tile, padded_n // n_tile)

    out = pl.pallas_call(
        classifier_kernel,
        out_shape=jax.ShapeDtypeStruct((padded_b, padded_n), jnp.float32),
        grid=grid,
        in_specs=[
            pl.BlockSpec((b_tile, TEXT_DIM), lambda bi, ni: (bi, 0)),
            pl.BlockSpec((b_tile, IMG_DIM), lambda bi, ni: (bi, 0)),
            pl.BlockSpec((CONCAT_DIM, n_tile), lambda bi, ni: (0, ni)),
            pl.BlockSpec((1, n_tile), lambda bi, ni: (0, ni)),
        ],
        out_specs=pl.BlockSpec((b_tile, n_tile), lambda bi, ni: (bi, ni)),
        scratch_shapes=[pltpu.VMEM((b_tile, CONCAT_DIM), jnp.bfloat16)],
        compiler_params=pltpu.CompilerParams(
            dimension_semantics=("parallel", "parallel")),
    )(text_emb, img_emb, w_prepared, bias_prepared)

    return out[:B, :n_labels]


if __name__ == "__main__":
    key = jax.random.PRNGKey(0)
    k_text, k_img, k_w, k_b = jax.random.split(key, 4)

    B = 4          # small batch
    n_labels = 16  # small label count

    # Stand-ins for CLIP's text_embeds / image_embeds (512-d each, standard CLIP).
    text_emb = jax.random.normal(k_text, (B, TEXT_DIM), dtype=jnp.float32)
    img_emb = jax.random.normal(k_img, (B, IMG_DIM), dtype=jnp.float32)

    # Deterministic init of nn.Linear(1024, n_labels) parameters (PyTorch layout).
    bound = 1.0 / (CONCAT_DIM ** 0.5)
    fc_weight = jax.random.uniform(k_w, (n_labels, CONCAT_DIM),
                                   minval=-bound, maxval=bound,
                                   dtype=jnp.float32)
    fc_bias = jax.random.uniform(k_b, (n_labels,),
                                 minval=-bound, maxval=bound,
                                 dtype=jnp.float32)

    # One-time parameter preparation (transpose + bf16 + lane padding).
    w_prep, b_prep, n_lab = prepare_classifier_params(fc_weight, fc_bias)

    out = classifier_forward(text_emb, img_emb, w_prep, b_prep, n_lab)
    out = jax.block_until_ready(out)

    # Reference: concat + linear with the same bf16-quantized operands, f32 math.
    concat = jnp.concatenate([text_emb, img_emb], axis=1)
    concat_q = concat.astype(jnp.bfloat16).astype(jnp.float32)
    w_q = fc_weight.astype(jnp.bfloat16).astype(jnp.float32)
    ref = concat_q @ w_q.T + fc_bias

    assert out.shape == (B, n_labels)
    assert jnp.allclose(out, ref, atol=1e-2, rtol=1e-2)

    print("KERNEL_OK")
</pallas_src>

<mosaic_0001>
module attributes {stable_mosaic.version = 11 : i64} {
  func.func @classifier_kernel(%arg0: i32, %arg1: i32, %arg2: memref<8x512xf32, #tpu.memory_space<vmem>>, %arg3: memref<8x512xf32, #tpu.memory_space<vmem>>, %arg4: memref<1024x128xbf16, #tpu.memory_space<vmem>>, %arg5: memref<1x128xf32, #tpu.memory_space<vmem>>, %arg6: memref<8x128xf32, #tpu.memory_space<vmem>>, %arg7: memref<8x1024xbf16, #tpu.memory_space<vmem>>) attributes {dimension_semantics = [#tpu.dimension_semantics<parallel>, #tpu.dimension_semantics<parallel>], iteration_bounds = array<i64: 1, 1>, scalar_prefetch = 0 : i64, scratch_operands = 1 : i64, tpu.core_type = #tpu.core_type<tc>, window_params = [{transform_indices = @transform_0, window_bounds = array<i64: 8, 512>}, {transform_indices = @transform_1, window_bounds = array<i64: 8, 512>}, {transform_indices = @transform_2, window_bounds = array<i64: 1024, 128>}, {transform_indices = @transform_3, window_bounds = array<i64: 1, 128>}, {transform_indices = @transform_4, window_bounds = array<i64: 8, 128>}]} {
    %c0 = arith.constant 0 : index
    %c0_0 = arith.constant 0 : index
    %0 = vector.load %arg2[%c0, %c0_0] : memref<8x512xf32, #tpu.memory_space<vmem>>, vector<8x512xf32>
    %1 = arith.truncf %0 : vector<8x512xf32> to vector<8x512xbf16>
    %c0_1 = arith.constant 0 : index
    %c0_2 = arith.constant 0 : index
    %2 = vector.load %arg7[%c0_1, %c0_2] : memref<8x1024xbf16, #tpu.memory_space<vmem>>, vector<8x512xbf16>
    tpu.vector_store %arg7[%c0_1, %c0_2], %1 {strides = array<i32>} : memref<8x1024xbf16, #tpu.memory_space<vmem>>, vector<8x512xbf16>,
    %c0_3 = arith.constant 0 : index
    %c0_4 = arith.constant 0 : index
    %3 = vector.load %arg3[%c0_3, %c0_4] : memref<8x512xf32, #tpu.memory_space<vmem>>, vector<8x512xf32>
    %4 = arith.truncf %3 : vector<8x512xf32> to vector<8x512xbf16>
    %c0_5 = arith.constant 0 : index
    %c512 = arith.constant 512 : index
    %5 = vector.load %arg7[%c0_5, %c512] : memref<8x1024xbf16, #tpu.memory_space<vmem>>, vector<8x512xbf16>
    tpu.vector_store %arg7[%c0_5, %c512], %4 {strides = array<i32>} : memref<8x1024xbf16, #tpu.memory_space<vmem>>, vector<8x512xbf16>,
    %c0_6 = arith.constant 0 : index
    %c0_7 = arith.constant 0 : index
    %6 = vector.load %arg7[%c0_6, %c0_7] : memref<8x1024xbf16, #tpu.memory_space<vmem>>, vector<8x1024xbf16>
    %c0_8 = arith.constant 0 : index
    %c0_9 = arith.constant 0 : index
    %7 = vector.load %arg4[%c0_8, %c0_9] : memref<1024x128xbf16, #tpu.memory_space<vmem>>, vector<1024x128xbf16>
    %cst = arith.constant dense<0.000000e+00> : vector<8x128xf32>
    %8 = tpu.matmul %6, %7, %cst {dimension_numbers = #tpu.dot_dimension_numbers<[1], [0], [0], [1], [0, 0, 1, 1], [], []>} : vector<8x1024xbf16>, vector<1024x128xbf16>, vector<8x128xf32> -> vector<8x128xf32>
    %c0_10 = arith.constant 0 : index
    %c0_11 = arith.constant 0 : index
    %9 = vector.load %arg5[%c0_10, %c0_11] : memref<1x128xf32, #tpu.memory_space<vmem>>, vector<1x128xf32>
    %10 = vector.broadcast %9 : vector<1x128xf32> to vector<8x128xf32>
    %11 = arith.addf %8, %10 : vector<8x128xf32>
    %c0_12 = arith.constant 0 : index
    %c0_13 = arith.constant 0 : index
    %12 = vector.load %arg6[%c0_12, %c0_13] : memref<8x128xf32, #tpu.memory_space<vmem>>, vector<8x128xf32>
    tpu.vector_store %arg6[%c0_12, %c0_13], %11 {strides = array<i32>} : memref<8x128xf32, #tpu.memory_space<vmem>>, vector<8x128xf32>,
    return
  }
  func.func @transform_0(%arg0: i32, %arg1: i32) -> (i32, i32) {
    %c0_i32 = arith.constant 0 : i32
    %c0_i32_0 = arith.constant 0 : i32
    return %arg0, %c0_i32 : i32, i32
  }
  func.func @transform_1(%arg0: i32, %arg1: i32) -> (i32, i32) {
    %c0_i32 = arith.constant 0 : i32
    %c0_i32_0 = arith.constant 0 : i32
    return %arg0, %c0_i32 : i32, i32
  }
  func.func @transform_2(%arg0: i32, %arg1: i32) -> (i32, i32) {
    %c0_i32 = arith.constant 0 : i32
    %c0_i32_0 = arith.constant 0 : i32
    return %c0_i32, %arg1 : i32, i32
  }
  func.func @transform_3(%arg0: i32, %arg1: i32) -> (i32, i32) {
    %c0_i32 = arith.constant 0 : i32
    %c0_i32_0 = arith.constant 0 : i32
    return %c0_i32, %arg1 : i32, i32
  }
  func.func @transform_4(%arg0: i32, %arg1: i32) -> (i32, i32) {
    %c0_i32 = arith.constant 0 : i32
    return %arg0, %arg1 : i32, i32
  }
}

</mosaic_0001>

<llo_original>
// kernel: tpu_custom_call.1
$region0: #{tpu_custom_call.1}
  #allocation0 [shape = 'u32[]', space=smem, size = 0x4, offset = 0x4, fixed_abs, tag = 'smem constant byte address 0x4 - core index']
  #allocation1 [shape = 'u32[144,128]{1,0:T(1,128)}', space=vmem, size = 0x12000, scoped, tag = 'internal scratch']
  #allocation2 [shape = 'bf16[8,1024]{1,0:T(8,128)(2,1)}', space=vmem, size = 0x4000, scoped, tag = 'scratch operand']
  %s0 = inlined_call_operand.hbm [shape: f32[8,512], index: 0, kind: input, shape index: {}]
  %s1 = inlined_call_operand.hbm [shape: f32[8,512], index: 1, kind: input, shape index: {}]
  %s2 = inlined_call_operand.hbm [shape: bf16[1024,128], index: 2, kind: input, shape index: {}]
  %s3 = inlined_call_operand.vmem [shape: f32[1,128], index: 3, kind: input, shape index: {}]
  %s4 = inlined_call_operand.hbm [shape: f32[8,128], index: 4, kind: output, shape index: {}]
  %s5 = sld [smem:[#allocation0]]
  $region38: #{tpu_custom_call.1} parent=0
    _
  %s7 = ssub.s32 1, %s5
  %s8 = scalar_select 0, %s7, %s5
  $region1: #{tpu_custom_call.1} parent=0
    #allocation3 [shape = 'u8[16384]{0}', space=vmem, size = 0x4000, scoped, tag = 'input window, operand 0, single buffered']
    #allocation4 [shape = 's32[1]{0}', space=sflag, size = 0x4, scoped, tag = 'scoped memory for tpu_custom_call.1']
    #allocation5 [shape = 's32[1]{0}', space=sflag, size = 0x4, scoped, tag = 'scoped memory for tpu_custom_call.1']
    #allocation6 [shape = 'u8[16384]{0}', space=vmem, size = 0x4000, scoped, tag = 'input window, operand 1, single buffered']
    #allocation7 [shape = 's32[1]{0}', space=sflag, size = 0x4, scoped, tag = 'scoped memory for tpu_custom_call.1']
    #allocation8 [shape = 'u8[262144]{0}', space=vmem, size = 0x40000, scoped, tag = 'input window, operand 2, single buffered']
    #allocation9 [shape = 'u8[4096]{0}', space=vmem, size = 0x1000, scoped, tag = 'output window, operand 0, single buffered']
    %9 = vsyncpa [#allocation4], 0
    %10 = vsyncpa [#allocation7], 0
    %11 = vsyncpa [#allocation5], 0
    // Predicated region
    $region2: #{tpu_custom_call.1} parent=1 // pred_check
      _
    $region3: #{tpu_custom_call.1} parent=1 // pred_check_branch
      %13 = sbr.rel (0) target = $region5
    $region4: #{tpu_custom_call.1} parent=1 // pred_region
      %s15 = ssub.s32 512, 512
      %16 = vsyncadd [#allocation4], %s15
      %s18 = sshll.u32 [#allocation3], 4
      %s19 = int_to_ptr.vmem [resolvable:$true] %s18
      %21 = dma.hbm_to_vmem [thread:$0]  %s0, 512, %s19, [#allocation4]
    $region5: #{tpu_custom_call.1} parent=1 // pred_fallthru
      _
    // Predicated region
    $region6: #{tpu_custom_call.1} parent=1 // pred_check
      _
    $region7: #{tpu_custom_call.1} parent=1 // pred_check_branch
      %23 = sbr.rel (0) target = $region9
    $region8: #{tpu_custom_call.1} parent=1 // pred_region
      %s25 = ssub.s32 512, 512
      %26 = vsyncadd [#allocation7], %s25
      %s28 = sshll.u32 [#allocation6], 4
      %s29 = int_to_ptr.vmem [resolvable:$true] %s28
      %31 = dma.hbm_to_vmem [thread:$0]  %s1, 512, %s29, [#allocation7]
    $region9: #{tpu_custom_call.1} parent=1 // pred_fallthru
      _
    // Predicated region
    $region10: #{tpu_custom_call.1} parent=1 // pred_check
      _
    $region11: #{tpu_custom_call.1} parent=1 // pred_check_branch
      %33 = sbr.rel (0) target = $region13
    $region12: #{tpu_custom_call.1} parent=1 // pred_region
      %s35 = ssub.s32 8192, 8192
      %36 = vsyncadd [#allocation7], %s35
      %s37 = sshll.u32 [#allocation8], 4
      %s38 = int_to_ptr.vmem [resolvable:$true] %s37
      %43 = dma.hbm_to_vmem [thread:$0]  %s2, 8192, %s38, [#allocation7], 64, 64, 4
    $region13: #{tpu_custom_call.1} parent=1 // pred_fallthru
      _
    // Predicated region
    $region14: #{tpu_custom_call.1} parent=1 // pred_check
      _
    $region15: #{tpu_custom_call.1} parent=1 // pred_check_branch
      %45 = sbr.rel (0) target = $region17
    $region16: #{tpu_custom_call.1} parent=1 // pred_region
      _
    $region17: #{tpu_custom_call.1} parent=1 // pred_fallthru
      _
    // Predicated region
    $region18: #{tpu_custom_call.1} parent=1 // pred_check
      _
    $region19: #{tpu_custom_call.1} parent=1 // pred_check_branch
      %47 = sbr.rel (0) target = $region21
    $region20: #{tpu_custom_call.1} parent=1 // pred_region
      %48 = dma.done [#allocation4], 512
    $region21: #{tpu_custom_call.1} parent=1 // pred_fallthru
      _
    // Predicated region
    $region22: #{tpu_custom_call.1} parent=1 // pred_check
      _
    $region23: #{tpu_custom_call.1} parent=1 // pred_check_branch
      %50 = sbr.rel (0) target = $region25
    $region24: #{tpu_custom_call.1} parent=1 // pred_region
      %51 = dma.done [#allocation7], 512
    $region25: #{tpu_custom_call.1} parent=1 // pred_fallthru
      _
    // Predicated region
    $region26: #{tpu_custom_call.1} parent=1 // pred_check
      _
    $region27: #{tpu_custom_call.1} parent=1 // pred_check_branch
      %53 = sbr.rel (0) target = $region29
    $region28: #{tpu_custom_call.1} parent=1 // pred_region
      %54 = dma.done [#allocation7], 8192
    $region29: #{tpu_custom_call.1} parent=1 // pred_fallthru
      _
    %v56 = vld [vmem:[#allocation3] sm:$0xff]
    %v57 = vld [vmem:[#allocation3 + $0x8] sm:$0xff]
    %v58 = vld [vmem:[#allocation3 + $0x10] sm:$0xff]
    %v59 = vld [vmem:[#allocation3 + $0x18] sm:$0xff]
    %v60 = vpack.c.bf16 %v56, %v56
    %v61 = vpack.c.bf16 %v57, %v57
    %v62 = vpack.c.bf16 %v58, %v58
    %v63 = vpack.c.bf16 %v59, %v59
    %v68 = vunpack.c.l.b16 %v60
    %v69 = vunpack.c.l.b16 %v61
    %v70 = vunpack.c.l.b16 %v62
    %v71 = vunpack.c.l.b16 %v63
    %v72 = vpack.c.b16 %v69, %v68
    %v73 = vpack.c.b16 %v71, %v70
    %76 = vst [vmem:[#allocation2] sm:$0xff] %v72
    %77 = vst [vmem:[#allocation2 + $0x8] sm:$0xff] %v73
    %v78 = vld [vmem:[#allocation6] sm:$0xff]
    %v79 = vld [vmem:[#allocation6 + $0x8] sm:$0xff]
    %v80 = vld [vmem:[#allocation6 + $0x10] sm:$0xff]
    %v81 = vld [vmem:[#allocation6 + $0x18] sm:$0xff]
    %v82 = vpack.c.bf16 %v78, %v78
    %v83 = vpack.c.bf16 %v79, %v79
    %v84 = vpack.c.bf16 %v80, %v80
    %v85 = vpack.c.bf16 %v81, %v81
    %v90 = vunpack.c.l.b16 %v82
    %v91 = vunpack.c.l.b16 %v83
    %v92 = vunpack.c.l.b16 %v84
    %v93 = vunpack.c.l.b16 %v85
    %v94 = vpack.c.b16 %v91, %v90
    %v95 = vpack.c.b16 %v93, %v92
    %98 = vst [vmem:[#allocation2 + $0x10] sm:$0xff] %v94
    %99 = vst [vmem:[#allocation2 + $0x18] sm:$0xff] %v95
    %v100 = vld [vmem:[#allocation2] sm:$0xff]
    %v101 = vld [vmem:[#allocation2 + $0x8] sm:$0xff]
    %v102 = vld [vmem:[#allocation2 + $0x10] sm:$0xff]
    %v103 = vld [vmem:[#allocation2 + $0x18] sm:$0xff]
    %v104 = vld [vmem:[#allocation8] sm:$0xf]
    %v105 = vld [vmem:[#allocation8 + $0x4] sm:$0xf]
    %v106 = vld [vmem:[#allocation8 + $0x8] sm:$0xf]
    %v107 = vld [vmem:[#allocation8 + $0xc] sm:$0xf]
    %v108 = vld [vmem:[#allocation8 + $0x10] sm:$0xf]
    %v109 = vld [vmem:[#allocation8 + $0x14] sm:$0xf]
    %v110 = vld [vmem:[#allocation8 + $0x18] sm:$0xf]
    %v111 = vld [vmem:[#allocation8 + $0x1c] sm:$0xf]
    %v112 = vld [vmem:[#allocation8 + $0x20] sm:$0xf]
    %v113 = vld [vmem:[#allocation8 + $0x24] sm:$0xf]
    %v114 = vld [vmem:[#allocation8 + $0x28] sm:$0xf]
    %v115 = vld [vmem:[#allocation8 + $0x2c] sm:$0xf]
    %v116 = vld [vmem:[#allocation8 + $0x30] sm:$0xf]
    %v117 = vld [vmem:[#allocation8 + $0x34] sm:$0xf]
    %v118 = vld [vmem:[#allocation8 + $0x38] sm:$0xf]
    %v119 = vld [vmem:[#allocation8 + $0x3c] sm:$0xf]
    %v120 = vld [vmem:[#allocation8 + $0x40] sm:$0xf]
    %v121 = vld [vmem:[#allocation8 + $0x44] sm:$0xf]
    %v122 = vld [vmem:[#allocation8 + $0x48] sm:$0xf]
    %v123 = vld [vmem:[#allocation8 + $0x4c] sm:$0xf]
    %v124 = vld [vmem:[#allocation8 + $0x50] sm:$0xf]
    %v125 = vld [vmem:[#allocation8 + $0x54] sm:$0xf]
    %v126 = vld [vmem:[#allocation8 + $0x58] sm:$0xf]
    %v127 = vld [vmem:[#allocation8 + $0x5c] sm:$0xf]
    %v128 = vld [vmem:[#allocation8 + $0x60] sm:$0xf]
    %v129 = vld [vmem:[#allocation8 + $0x64] sm:$0xf]
    %v130 = vld [vmem:[#allocation8 + $0x68] sm:$0xf]
    %v131 = vld [vmem:[#allocation8 + $0x6c] sm:$0xf]
    %v132 = vld [vmem:[#allocation8 + $0x70] sm:$0xf]
    %v133 = vld [vmem:[#allocation8 + $0x74] sm:$0xf]
    %v134 = vld [vmem:[#allocation8 + $0x78] sm:$0xf]
    %v135 = vld [vmem:[#allocation8 + $0x7c] sm:$0xf]
    %v136 = vld [vmem:[#allocation8 + $0x80] sm:$0xf]
    %v137 = vld [vmem:[#allocation8 + $0x84] sm:$0xf]
    %v138 = vld [vmem:[#allocation8 + $0x88] sm:$0xf]
    %v139 = vld [vmem:[#allocation8 + $0x8c] sm:$0xf]
    %v140 = vld [vmem:[#allocation8 + $0x90] sm:$0xf]
    %v141 = vld [vmem:[#allocation8 + $0x94] sm:$0xf]
    %v142 = vld [vmem:[#allocation8 + $0x98] sm:$0xf]
    %v143 = vld [vmem:[#allocation8 + $0x9c] sm:$0xf]
    %v144 = vld [vmem:[#allocation8 + $0xa0] sm:$0xf]
    %v145 = vld [vmem:[#allocation8 + $0xa4] sm:$0xf]
    %v146 = vld [vmem:[#allocation8 + $0xa8] sm:$0xf]
    %v147 = vld [vmem:[#allocation8 + $0xac] sm:$0xf]
    %v148 = vld [vmem:[#allocation8 + $0xb0] sm:$0xf]
    %v149 = vld [vmem:[#allocation8 + $0xb4] sm:$0xf]
    %v150 = vld [vmem:[#allocation8 + $0xb8] sm:$0xf]
    %v151 = vld [vmem:[#allocation8 + $0xbc] sm:$0xf]
    %v152 = vld [vmem:[#allocation8 + $0xc0] sm:$0xf]
    %v153 = vld [vmem:[#allocation8 + $0xc4] sm:$0xf]
    %v154 = vld [vmem:[#allocation8 + $0xc8] sm:$0xf]
    %v155 = vld [vmem:[#allocation8 + $0xcc] sm:$0xf]
    %v156 = vld [vmem:[#allocation8 + $0xd0] sm:$0xf]
    %v157 = vld [vmem:[#allocation8 + $0xd4] sm:$0xf]
    %v158 = vld [vmem:[#allocation8 + $0xd8] sm:$0xf]
    %v159 = vld [vmem:[#allocation8 + $0xdc] sm:$0xf]
    %v160 = vld [vmem:[#allocation8 + $0xe0] sm:$0xf]
    %v161 = vld [vmem:[#allocation8 + $0xe4] sm:$0xf]
    %v162 = vld [vmem:[#allocation8 + $0xe8] sm:$0xf]
    %v163 = vld [vmem:[#allocation8 + $0xec] sm:$0xf]
    %v164 = vld [vmem:[#allocation8 + $0xf0] sm:$0xf]
    %v165 = vld [vmem:[#allocation8 + $0xf4] sm:$0xf]
    %v166 = vld [vmem:[#allocation8 + $0xf8] sm:$0xf]
    %v167 = vld [vmem:[#allocation8 + $0xfc] sm:$0xf]
    %v168 = vld [vmem:[#allocation8 + $0x100] sm:$0xf]
    %v169 = vld [vmem:[#allocation8 + $0x104] sm:$0xf]
    %v170 = vld [vmem:[#allocation8 + $0x108] sm:$0xf]
    %v171 = vld [vmem:[#allocation8 + $0x10c] sm:$0xf]
    %v172 = vld [vmem:[#allocation8 + $0x110] sm:$0xf]
    %v173 = vld [vmem:[#allocation8 + $0x114] sm:$0xf]
    %v174 = vld [vmem:[#allocation8 + $0x118] sm:$0xf]
    %v175 = vld [vmem:[#allocation8 + $0x11c] sm:$0xf]
    %v176 = vld [vmem:[#allocation8 + $0x120] sm:$0xf]
    %v177 = vld [vmem:[#allocation8 + $0x124] sm:$0xf]
    %v178 = vld [vmem:[#allocation8 + $0x128] sm:$0xf]
    %v179 = vld [vmem:[#allocation8 + $0x12c] sm:$0xf]
    %v180 = vld [vmem:[#allocation8 + $0x130] sm:$0xf]
    %v181 = vld [vmem:[#allocation8 + $0x134] sm:$0xf]
    %v182 = vld [vmem:[#allocation8 + $0x138] sm:$0xf]
    %v183 = vld [vmem:[#allocation8 + $0x13c] sm:$0xf]
    %v184 = vld [vmem:[#allocation8 + $0x140] sm:$0xf]
    %v185 = vld [vmem:[#allocation8 + $0x144] sm:$0xf]
    %v186 = vld [vmem:[#allocation8 + $0x148] sm:$0xf]
    %v187 = vld [vmem:[#allocation8 + $0x14c] sm:$0xf]
    %v188 = vld [vmem:[#allocation8 + $0x150] sm:$0xf]
    %v189 = vld [vmem:[#allocation8 + $0x154] sm:$0xf]
    %v190 = vld [vmem:[#allocation8 + $0x158] sm:$0xf]
    %v191 = vld [vmem:[#allocation8 + $0x15c] sm:$0xf]
    %v192 = vld [vmem:[#allocation8 + $0x160] sm:$0xf]
    %v193 = vld [vmem:[#allocation8 + $0x164] sm:$0xf]
    %v194 = vld [vmem:[#allocation8 + $0x168] sm:$0xf]
    %v195 = vld [vmem:[#allocation8 + $0x16c] sm:$0xf]
    %v196 = vld [vmem:[#allocation8 + $0x170] sm:$0xf]
    %v197 = vld [vmem:[#allocation8 + $0x174] sm:$0xf]
    %v198 = vld [vmem:[#allocation8 + $0x178] sm:$0xf]
    %v199 = vld [vmem:[#allocation8 + $0x17c] sm:$0xf]
    %v200 = vld [vmem:[#allocation8 + $0x180] sm:$0xf]
    %v201 = vld [vmem:[#allocation8 + $0x184] sm:$0xf]
    %v202 = vld [vmem:[#allocation8 + $0x188] sm:$0xf]
    %v203 = vld [vmem:[#allocation8 + $0x18c] sm:$0xf]
    %v204 = vld [vmem:[#allocation8 + $0x190] sm:$0xf]
    %v205 = vld [vmem:[#allocation8 + $0x194] sm:$0xf]
    %v206 = vld [vmem:[#allocation8 + $0x198] sm:$0xf]
    %v207 = vld [vmem:[#allocation8 + $0x19c] sm:$0xf]
    %v208 = vld [vmem:[#allocation8 + $0x1a0] sm:$0xf]
    %v209 = vld [vmem:[#allocation8 + $0x1a4] sm:$0xf]
    %v210 = vld [vmem:[#allocation8 + $0x1a8] sm:$0xf]
    %v211 = vld [vmem:[#allocation8 + $0x1ac] sm:$0xf]
    %v212 = vld [vmem:[#allocation8 + $0x1b0] sm:$0xf]
    %v213 = vld [vmem:[#allocation8 + $0x1b4] sm:$0xf]
    %v214 = vld [vmem:[#allocation8 + $0x1b8] sm:$0xf]
    %v215 = vld [vmem:[#allocation8 + $0x1bc] sm:$0xf]
    %v216 = vld [vmem:[#allocation8 + $0x1c0] sm:$0xf]
    %v217 = vld [vmem:[#allocation8 + $0x1c4] sm:$0xf]
    %v218 = vld [vmem:[#allocation8 + $0x1c8] sm:$0xf]
    %v219 = vld [vmem:[#allocation8 + $0x1cc] sm:$0xf]
    %v220 = vld [vmem:[#allocation8 + $0x1d0] sm:$0xf]
    %v221 = vld [vmem:[#allocation8 + $0x1d4] sm:$0xf]
    %v222 = vld [vmem:[#allocation8 + $0x1d8] sm:$0xf]
    %v223 = vld [vmem:[#allocation8 + $0x1dc] sm:$0xf]
    %v224 = vld [vmem:[#allocation8 + $0x1e0] sm:$0xf]
    %v225 = vld [vmem:[#allocation8 + $0x1e4] sm:$0xf]
    %v226 = vld [vmem:[#allocation8 + $0x1e8] sm:$0xf]
    %v227 = vld [vmem:[#allocation8 + $0x1ec] sm:$0xf]
    %v228 = vld [vmem:[#allocation8 + $0x1f0] sm:$0xf]
    %v229 = vld [vmem:[#allocation8 + $0x1f4] sm:$0xf]
    %v230 = vld [vmem:[#allocation8 + $0x1f8] sm:$0xf]
    %v231 = vld [vmem:[#allocation8 + $0x1fc] sm:$0xf]
    %v232 = vld [vmem:[%s3] sm:$0x1]
    %v234 = vlaneseq
    %v235 = vshrl.u32 %v234, 7
    %v236 = vsub.s32 0, %v235
    %v237 = vrot.slane %v232, %v236
    %v243 = vunpack.c.l.b16 %v100
    %v244 = vunpack.c.h.b16 %v100
    %v245 = vunpack.c.l.b16 %v101
    %v246 = vunpack.c.h.b16 %v101
    %v247 = vunpack.c.l.b16 %v102
    %v248 = vunpack.c.h.b16 %v102
    %v249 = vunpack.c.l.b16 %v103
    %v250 = vunpack.c.h.b16 %v103
    %v251 = vpack.c.b16 %v243, %v243
    %v252 = vpack.c.b16 %v244, %v244
    %v253 = vpack.c.b16 %v245, %v245
    %v254 = vpack.c.b16 %v246, %v246
    %v255 = vpack.c.b16 %v247, %v247
    %v256 = vpack.c.b16 %v248, %v248
    %v257 = vpack.c.b16 %v249, %v249
    %v258 = vpack.c.b16 %v250, %v250
    %v395 = vunpack.c.l.b16 %v104
    %v396 = vunpack.c.l.b16 %v105
    %v397 = vunpack.c.l.b16 %v106
    %v398 = vunpack.c.l.b16 %v107
    %v399 = vunpack.c.l.b16 %v108
    %v400 = vunpack.c.l.b16 %v109
    %v401 = vunpack.c.l.b16 %v110
    %v402 = vunpack.c.l.b16 %v111
    %v403 = vunpack.c.l.b16 %v112
    %v404 = vunpack.c.l.b16 %v113
    %v405 = vunpack.c.l.b16 %v114
    %v406 = vunpack.c.l.b16 %v115
    %v407 = vunpack.c.l.b16 %v116
    %v408 = vunpack.c.l.b16 %v117
    %v409 = vunpack.c.l.b16 %v118
    %v410 = vunpack.c.l.b16 %v119
    %v411 = vunpack.c.l.b16 %v120
    %v412 = vunpack.c.l.b16 %v121
    %v413 = vunpack.c.l.b16 %v122
    %v414 = vunpack.c.l.b16 %v123
    %v415 = vunpack.c.l.b16 %v124
    %v416 = vunpack.c.l.b16 %v125
    %v417 = vunpack.c.l.b16 %v126
    %v418 = vunpack.c.l.b16 %v127
    %v419 = vunpack.c.l.b16 %v128
    %v420 = vunpack.c.l.b16 %v129
    %v421 = vunpack.c.l.b16 %v130
    %v422 = vunpack.c.l.b16 %v131
    %v423 = vunpack.c.l.b16 %v132
    %v424 = vunpack.c.l.b16 %v133
    %v425 = vunpack.c.l.b16 %v134
    %v426 = vunpack.c.l.b16 %v135
    %v427 = vunpack.c.l.b16 %v136
    %v428 = vunpack.c.l.b16 %v137
    %v429 = vunpack.c.l.b16 %v138
    %v430 = vunpack.c.l.b16 %v139
    %v431 = vunpack.c.l.b16 %v140
    %v432 = vunpack.c.l.b16 %v141
    %v433 = vunpack.c.l.b16 %v142
    %v434 = vunpack.c.l.b16 %v143
    %v435 = vunpack.c.l.b16 %v144
    %v436 = vunpack.c.l.b16 %v145
    %v437 = vunpack.c.l.b16 %v146
    %v438 = vunpack.c.l.b16 %v147
    %v439 = vunpack.c.l.b16 %v148
    %v440 = vunpack.c.l.b16 %v149
    %v441 = vunpack.c.l.b16 %v150
    %v442 = vunpack.c.l.b16 %v151
    %v443 = vunpack.c.l.b16 %v152
    %v444 = vunpack.c.l.b16 %v153
    %v445 = vunpack.c.l.b16 %v154
    %v446 = vunpack.c.l.b16 %v155
    %v447 = vunpack.c.l.b16 %v156
    %v448 = vunpack.c.l.b16 %v157
    %v449 = vunpack.c.l.b16 %v158
    %v450 = vunpack.c.l.b16 %v159
    %v451 = vunpack.c.l.b16 %v160
    %v452 = vunpack.c.l.b16 %v161
    %v453 = vunpack.c.l.b16 %v162
    %v454 = vunpack.c.l.b16 %v163
    %v455 = vunpack.c.l.b16 %v164
    %v456 = vunpack.c.l.b16 %v165
    %v457 = vunpack.c.l.b16 %v166
    %v458 = vunpack.c.l.b16 %v167
    %v459 = vunpack.c.l.b16 %v168
    %v460 = vunpack.c.l.b16 %v169
    %v461 = vunpack.c.l.b16 %v170
    %v462 = vunpack.c.l.b16 %v171
    %v463 = vunpack.c.l.b16 %v172
    %v464 = vunpack.c.l.b16 %v173
    %v465 = vunpack.c.l.b16 %v174
    %v466 = vunpack.c.l.b16 %v175
    %v467 = vunpack.c.l.b16 %v176
    %v468 = vunpack.c.l.b16 %v177
    %v469 = vunpack.c.l.b16 %v178
    %v470 = vunpack.c.l.b16 %v179
    %v471 = vunpack.c.l.b16 %v180
    %v472 = vunpack.c.l.b16 %v181
    %v473 = vunpack.c.l.b16 %v182
    %v474 = vunpack.c.l.b16 %v183
    %v475 = vunpack.c.l.b16 %v184
    %v476 = vunpack.c.l.b16 %v185
    %v477 = vunpack.c.l.b16 %v186
    %v478 = vunpack.c.l.b16 %v187
    %v479 = vunpack.c.l.b16 %v188
    %v480 = vunpack.c.l.b16 %v189
    %v481 = vunpack.c.l.b16 %v190
    %v482 = vunpack.c.l.b16 %v191
    %v483 = vunpack.c.l.b16 %v192
    %v484 = vunpack.c.l.b16 %v193
    %v485 = vunpack.c.l.b16 %v194
    %v486 = vunpack.c.l.b16 %v195
    %v487 = vunpack.c.l.b16 %v196
    %v488 = vunpack.c.l.b16 %v197
    %v489 = vunpack.c.l.b16 %v198
    %v490 = vunpack.c.l.b16 %v199
    %v491 = vunpack.c.l.b16 %v200
    %v492 = vunpack.c.l.b16 %v201
    %v493 = vunpack.c.l.b16 %v202
    %v494 = vunpack.c.l.b16 %v203
    %v495 = vunpack.c.l.b16 %v204
    %v496 = vunpack.c.l.b16 %v205
    %v497 = vunpack.c.l.b16 %v206
    %v498 = vunpack.c.l.b16 %v207
    %v499 = vunpack.c.l.b16 %v208
    %v500 = vunpack.c.l.b16 %v209
    %v501 = vunpack.c.l.b16 %v210
    %v502 = vunpack.c.l.b16 %v211
    %v503 = vunpack.c.l.b16 %v212
    %v504 = vunpack.c.l.b16 %v213
    %v505 = vunpack.c.l.b16 %v214
    %v506 = vunpack.c.l.b16 %v215
    %v507 = vunpack.c.l.b16 %v216
    %v508 = vunpack.c.l.b16 %v217
    %v509 = vunpack.c.l.b16 %v218
    %v510 = vunpack.c.l.b16 %v219
    %v511 = vunpack.c.l.b16 %v220
    %v512 = vunpack.c.l.b16 %v221
    %v513 = vunpack.c.l.b16 %v222
    %v514 = vunpack.c.l.b16 %v223
    %v515 = vunpack.c.l.b16 %v224
    %v516 = vunpack.c.l.b16 %v225
    %v517 = vunpack.c.l.b16 %v226
    %v518 = vunpack.c.l.b16 %v227
    %v519 = vunpack.c.l.b16 %v228
    %v520 = vunpack.c.l.b16 %v229
    %v521 = vunpack.c.l.b16 %v230
    %v522 = vunpack.c.l.b16 %v231
    %v523 = vpack.c.b16 %v396, %v395
    %v524 = vpack.c.b16 %v398, %v397
    %v525 = vpack.c.b16 %v400, %v399
    %v526 = vpack.c.b16 %v402, %v401
    %v527 = vpack.c.b16 %v404, %v403
    %v528 = vpack.c.b16 %v406, %v405
    %v529 = vpack.c.b16 %v408, %v407
    %v530 = vpack.c.b16 %v410, %v409
    %v531 = vpack.c.b16 %v412, %v411
    %v532 = vpack.c.b16 %v414, %v413
    %v533 = vpack.c.b16 %v416, %v415
    %v534 = vpack.c.b16 %v418, %v417
    %v535 = vpack.c.b16 %v420, %v419
    %v536 = vpack.c.b16 %v422, %v421
    %v537 = vpack.c.b16 %v424, %v423
    %v538 = vpack.c.b16 %v426, %v425
    %v539 = vpack.c.b16 %v428, %v427
    %v540 = vpack.c.b16 %v430, %v429
    %v541 = vpack.c.b16 %v432, %v431
    %v542 = vpack.c.b16 %v434, %v433
    %v543 = vpack.c.b16 %v436, %v435
    %v544 = vpack.c.b16 %v438, %v437
    %v545 = vpack.c.b16 %v440, %v439
    %v546 = vpack.c.b16 %v442, %v441
    %v547 = vpack.c.b16 %v444, %v443
    %v548 = vpack.c.b16 %v446, %v445
    %v549 = vpack.c.b16 %v448, %v447
    %v550 = vpack.c.b16 %v450, %v449
    %v551 = vpack.c.b16 %v452, %v451
    %v552 = vpack.c.b16 %v454, %v453
    %v553 = vpack.c.b16 %v456, %v455
    %v554 = vpack.c.b16 %v458, %v457
    %v555 = vpack.c.b16 %v460, %v459
    %v556 = vpack.c.b16 %v462, %v461
    %v557 = vpack.c.b16 %v464, %v463
    %v558 = vpack.c.b16 %v466, %v465
    %v559 = vpack.c.b16 %v468, %v467
    %v560 = vpack.c.b16 %v470, %v469
    %v561 = vpack.c.b16 %v472, %v471
    %v562 = vpack.c.b16 %v474, %v473
    %v563 = vpack.c.b16 %v476, %v475
    %v564 = vpack.c.b16 %v478, %v477
    %v565 = vpack.c.b16 %v480, %v479
    %v566 = vpack.c.b16 %v482, %v481
    %v567 = vpack.c.b16 %v484, %v483
    %v568 = vpack.c.b16 %v486, %v485
    %v569 = vpack.c.b16 %v488, %v487
    %v570 = vpack.c.b16 %v490, %v489
    %v571 = vpack.c.b16 %v492, %v491
    %v572 = vpack.c.b16 %v494, %v493
    %v573 = vpack.c.b16 %v496, %v495
    %v574 = vpack.c.b16 %v498, %v497
    %v575 = vpack.c.b16 %v500, %v499
    %v576 = vpack.c.b16 %v502, %v501
    %v577 = vpack.c.b16 %v504, %v503
    %v578 = vpack.c.b16 %v506, %v505
    %v579 = vpack.c.b16 %v508, %v507
    %v580 = vpack.c.b16 %v510, %v509
    %v581 = vpack.c.b16 %v512, %v511
    %v582 = vpack.c.b16 %v514, %v513
    %v583 = vpack.c.b16 %v516, %v515
    %v584 = vpack.c.b16 %v518, %v517
    %v585 = vpack.c.b16 %v520, %v519
    %v586 = vpack.c.b16 %v522, %v521
    %651 = vmatprep.subr.bf16.mxu0 0
    %652 = vmatpush1.bf16.msra.mxu0 %v530
    %653 = vmatprep.subr.bf16.mxu0 0
    %654 = vmatpush1.bf16.msra.mxu0 %v529
    %655 = vmatprep.subr.bf16.mxu0 0
    %656 = vmatpush1.bf16.msra.mxu0 %v528
    %657 = vmatprep.subr.bf16.mxu0 0
    %658 = vmatpush1.bf16.msra.mxu0 %v527
    %659 = vmatprep.subr.bf16.mxu0 0
    %660 = vmatpush1.bf16.msra.mxu0 %v526
    %661 = vmatprep.subr.bf16.mxu0 0
    %662 = vmatpush1.bf16.msra.mxu0 %v525
    %663 = vmatprep.subr.bf16.mxu0 0
    %664 = vmatpush1.bf16.msra.mxu0 %v524
    %665 = vmatprep.subr.bf16.mxu0 0
    %666 = vmatpush1.bf16.msra.mxu0 %v523
    %667 = vmatprep.subr.bf16.mxu0 0
    %668 = vmatpush2.bf16.msra.mxu0 %v538
    %669 = vmatprep.subr.bf16.mxu0 0
    %670 = vmatpush2.bf16.msra.mxu0 %v537
    %671 = vmatprep.subr.bf16.mxu0 0
    %672 = vmatpush2.bf16.msra.mxu0 %v536
    %673 = vmatprep.subr.bf16.mxu0 0
    %674 = vmatpush2.bf16.msra.mxu0 %v535
    %675 = vmatprep.subr.bf16.mxu0 0
    %676 = vmatpush2.bf16.msra.mxu0 %v534
    %677 = vmatprep.subr.bf16.mxu0 0
    %678 = vmatpush2.bf16.msra.mxu0 %v533
    %679 = vmatprep.subr.bf16.mxu0 0
    %680 = vmatpush2.bf16.msra.mxu0 %v532
    %681 = vmatprep.subr.bf16.mxu0 0
    %682 = vmatpush2.bf16.msra.mxu0 %v531
    %683 = vmatprep.mubr.bf16.mxu0 %v252
    %684 = vmatmul.mubr.bf16.gmra.mxu0 %v251
    %v685 = vpop.f32.mrf.mxu0
    %v686 = vadd.f32 %v237, %v685
    %v687 = vpop.f32.mrf.mxu0
    %v688 = vpop.f32.mrf.mxu0
    %v689 = vpop.f32.mrf.mxu0
    %690 = vdwg.mxu0
    %691 = vmatprep.subr.bf16.mxu0 0
    %692 = vmatpush1.bf16.msra.mxu0 %v546
    %693 = vmatprep.subr.bf16.mxu0 0
    %694 = vmatpush1.bf16.msra.mxu0 %v545
    %695 = vmatprep.subr.bf16.mxu0 0
    %696 = vmatpush1.bf16.msra.mxu0 %v544
    %697 = vmatprep.subr.bf16.mxu0 0
    %698 = vmatpush1.bf16.msra.mxu0 %v543
    %699 = vmatprep.subr.bf16.mxu0 0
    %700 = vmatpush1.bf16.msra.mxu0 %v542
    %701 = vmatprep.subr.bf16.mxu0 0
    %702 = vmatpush1.bf16.msra.mxu0 %v541
    %703 = vmatprep.subr.bf16.mxu0 0
    %704 = vmatpush1.bf16.msra.mxu0 %v540
    %705 = vmatprep.subr.bf16.mxu0 0
    %706 = vmatpush1.bf16.msra.mxu0 %v539
    %707 = vmatprep.subr.bf16.mxu0 0
    %708 = vmatpush2.bf16.msra.mxu0 %v554
    %709 = vmatprep.subr.bf16.mxu0 0
    %710 = vmatpush2.bf16.msra.mxu0 %v553
    %711 = vmatprep.subr.bf16.mxu0 0
    %712 = vmatpush2.bf16.msra.mxu0 %v552
    %713 = vmatprep.subr.bf16.mxu0 0
    %714 = vmatpush2.bf16.msra.mxu0 %v551
    %715 = vmatprep.subr.bf16.mxu0 0
    %716 = vmatpush2.bf16.msra.mxu0 %v550
    %717 = vmatprep.subr.bf16.mxu0 0
    %718 = vmatpush2.bf16.msra.mxu0 %v549
    %719 = vmatprep.subr.bf16.mxu0 0
    %720 = vmatpush2.bf16.msra.mxu0 %v548
    %721 = vmatprep.subr.bf16.mxu0 0
    %722 = vmatpush2.bf16.msra.mxu0 %v547
    %723 = vmatprep.mubr.bf16.mxu0 %v254
    %724 = vmatmul.mubr.bf16.gmra.mxu0 %v253
    %v725 = vpop.f32.mrf.mxu0
    %v726 = vadd.f32 %v686, %v725
    %v727 = vpop.f32.mrf.mxu0
    %v728 = vpop.f32.mrf.mxu0
    %v729 = vpop.f32.mrf.mxu0
    %730 = vdwg.mxu0
    %731 = vmatprep.subr.bf16.mxu0 0
    %732 = vmatpush1.bf16.msra.mxu0 %v562
    %733 = vmatprep.subr.bf16.mxu0 0
    %734 = vmatpush1.bf16.msra.mxu0 %v561
    %735 = vmatprep.subr.bf16.mxu0 0
    %736 = vmatpush1.bf16.msra.mxu0 %v560
    %737 = vmatprep.subr.bf16.mxu0 0
    %738 = vmatpush1.bf16.msra.mxu0 %v559
    %739 = vmatprep.subr.bf16.mxu0 0
    %740 = vmatpush1.bf16.msra.mxu0 %v558
    %741 = vmatprep.subr.bf16.mxu0 0
    %742 = vmatpush1.bf16.msra.mxu0 %v557
    %743 = vmatprep.subr.bf16.mxu0 0
    %744 = vmatpush1.bf16.msra.mxu0 %v556
    %745 = vmatprep.subr.bf16.mxu0 0
    %746 = vmatpush1.bf16.msra.mxu0 %v555
    %747 = vmatprep.subr.bf16.mxu0 0
    %748 = vmatpush2.bf16.msra.mxu0 %v570
    %749 = vmatprep.subr.bf16.mxu0 0
    %750 = vmatpush2.bf16.msra.mxu0 %v569
    %751 = vmatprep.subr.bf16.mxu0 0
    %752 = vmatpush2.bf16.msra.mxu0 %v568
    %753 = vmatprep.subr.bf16.mxu0 0
    %754 = vmatpush2.bf16.msra.mxu0 %v567
    %755 = vmatprep.subr.bf16.mxu0 0
    %756 = vmatpush2.bf16.msra.mxu0 %v566
    %757 = vmatprep.subr.bf16.mxu0 0
    %758 = vmatpush2.bf16.msra.mxu0 %v565
    %759 = vmatprep.subr.bf16.mxu0 0
    %760 = vmatpush2.bf16.msra.mxu0 %v564
    %761 = vmatprep.subr.bf16.mxu0 0
    %762 = vmatpush2.bf16.msra.mxu0 %v563
    %763 = vmatprep.mubr.bf16.mxu0 %v256
    %764 = vmatmul.mubr.bf16.gmra.mxu0 %v255
    %v765 = vpop.f32.mrf.mxu0
    %v766 = vadd.f32 %v726, %v765
    %v767 = vpop.f32.mrf.mxu0
    %v768 = vpop.f32.mrf.mxu0
    %v769 = vpop.f32.mrf.mxu0
    %770 = vdwg.mxu0
    %771 = vmatprep.subr.bf16.mxu0 0
    %772 = vmatpush1.bf16.msra.mxu0 %v578
    %773 = vmatprep.subr.bf16.mxu0 0
    %774 = vmatpush1.bf16.msra.mxu0 %v577
    %775 = vmatprep.subr.bf16.mxu0 0
    %776 = vmatpush1.bf16.msra.mxu0 %v576
    %777 = vmatprep.subr.bf16.mxu0 0
    %778 = vmatpush1.bf16.msra.mxu0 %v575
    %779 = vmatprep.subr.bf16.mxu0 0
    %780 = vmatpush1.bf16.msra.mxu0 %v574
    %781 = vmatprep.subr.bf16.mxu0 0
    %782 = vmatpush1.bf16.msra.mxu0 %v573
    %783 = vmatprep.subr.bf16.mxu0 0
    %784 = vmatpush1.bf16.msra.mxu0 %v572
    %785 = vmatprep.subr.bf16.mxu0 0
    %786 = vmatpush1.bf16.msra.mxu0 %v571
    %787 = vmatprep.subr.bf16.mxu0 0
    %788 = vmatpush2.bf16.msra.mxu0 %v586
    %789 = vmatprep.subr.bf16.mxu0 0
    %790 = vmatpush2.bf16.msra.mxu0 %v585
    %791 = vmatprep.subr.bf16.mxu0 0
    %792 = vmatpush2.bf16.msra.mxu0 %v584
    %793 = vmatprep.subr.bf16.mxu0 0
    %794 = vmatpush2.bf16.msra.mxu0 %v583
    %795 = vmatprep.subr.bf16.mxu0 0
    %796 = vmatpush2.bf16.msra.mxu0 %v582
    %797 = vmatprep.subr.bf16.mxu0 0
    %798 = vmatpush2.bf16.msra.mxu0 %v581
    %799 = vmatprep.subr.bf16.mxu0 0
    %800 = vmatpush2.bf16.msra.mxu0 %v580
    %801 = vmatprep.subr.bf16.mxu0 0
    %802 = vmatpush2.bf16.msra.mxu0 %v579
    %803 = vmatprep.mubr.bf16.mxu0 %v258
    %804 = vmatmul.mubr.bf16.gmra.mxu0 %v257
    %v805 = vpop.f32.mrf.mxu0
    %v806 = vadd.f32 %v766, %v805
    %v807 = vpop.f32.mrf.mxu0
    %v808 = vpop.f32.mrf.mxu0
    %v809 = vpop.f32.mrf.mxu0
    %810 = vdwg.mxu0
    %811 = vst [vmem:[#allocation9] sm:$0xff] %v806
    // Predicated region
    $region30: #{tpu_custom_call.1} parent=1 // pred_check
      _
    $region31: #{tpu_custom_call.1} parent=1 // pred_check_branch
      %813 = sbr.rel (0) target = $region33
    $region32: #{tpu_custom_call.1} parent=1 // pred_region
      %s815 = ssub.s32 128, 128
      %816 = vsyncadd [#allocation5], %s815
      %s818 = sshll.u32 [#allocation9], 4
      %s819 = int_to_ptr.vmem [resolvable:$true] %s818
      %821 = dma.vmem_to_hbm [thread:$0]  %s819, 128, %s4, [#allocation5]
    $region33: #{tpu_custom_call.1} parent=1 // pred_fallthru
      _
    // Predicated region
    $region34: #{tpu_custom_call.1} parent=1 // pred_check
      _
    $region35: #{tpu_custom_call.1} parent=1 // pred_check_branch
      %823 = sbr.rel (0) target = $region37
    $region36: #{tpu_custom_call.1} parent=1 // pred_region
      %824 = dma.done [#allocation5], 128
    $region37: #{tpu_custom_call.1} parent=1 // pred_fallthru
      _
    %825 = vsyncpa [#allocation4], 1
    %826 = vsyncpa [#allocation7], 1
    %827 = vsyncpa [#allocation5], 1

</llo_original>
